<compile_context>
chip_gen: v6e
topology: v6e:2x2x1
jax: 0.10.0
libtpu: 0.0.40
codegen_flags: <defaults>
</compile_context>

<pallas_src>
import functools

import jax
import jax.numpy as jnp
from jax import lax
from jax.experimental import pallas as pl
from jax.experimental.pallas import tpu as pltpu


_NEG_INF = float("-inf")


# ----------------------------- pooling helpers ----------------------------- #

def _row_max_incremental(x_flat, wpos, W, radii):
    """Shared horizontal (W-direction) max pass, incremental over radii.

    x_flat : (C, S) lane-dense image, S = H*W
    wpos   : (C, S) int32, lane position modulo W
    radii  : needed pooling radii
    Returns dict radius -> (C, S) row-max (max over dx in [-r, r], -inf outside row).
    Every shifted term is a first-level shift of the raw image, so masking the
    cross-row lanes to -inf reproduces MaxPool2d's implicit -inf padding exactly.
    """
    C, S = x_flat.shape
    out = {}
    cur = x_flat
    prev = 0
    for r in sorted(set(int(r) for r in radii)):
        for d in range(prev + 1, r + 1):
            fill = jnp.full((C, d), _NEG_INF, x_flat.dtype)
            plus = jnp.concatenate([x_flat[:, d:], fill], axis=1)       # x[., j+d]
            minus = jnp.concatenate([fill, x_flat[:, :S - d]], axis=1)  # x[., j-d]
            cur = jnp.maximum(cur, jnp.where(wpos < W - d, plus, _NEG_INF))
            cur = jnp.maximum(cur, jnp.where(wpos >= d, minus, _NEG_INF))
        out[r] = cur
        prev = r
    return out


def _col_max_doubling(cache, W, Hp, r):
    """Vertical (H-direction) max over [-r, r] via shift doubling.

    cache[q] : (C, (Hp - 2*q) * W) array; row index j corresponds to padded row j+q
               and holds the radius-q vertical max of the -inf padded base cache[0].
    The -inf pad rows are physically present, so composed partial maxima are exact,
    which is what makes doubling (radius q + s from two shifted radius-q arrays) valid.
    """
    if r in cache:
        return cache[r]
    while True:
        q = max(k for k in cache if k < r)
        s = r - q
        if s <= q + 1:
            break
        _col_max_doubling(cache, W, Hp, 2 * q + 1)      # build a stepping stone
    a = cache[q]
    L = (Hp - 2 * r) * W
    out = jnp.maximum(a[:, :L], a[:, 2 * s * W:2 * s * W + L])
    if s > q:                                           # the two windows leave a gap
        out = jnp.maximum(out, a[:, s * W:s * W + L])
    cache[r] = out
    return out


# ------------------------------- Pallas kernel ------------------------------ #

def _spp_kernel(x_ref, w_ref, b_ref, o_ref, act_ref, *, H, W, C, pool_radii):
    """Fused SPP: [identity + max-pools] -> 1x1 conv (BN scale folded) -> +bias -> swish.

    x_ref   : (1, C, H*W)      lane-dense NCHW input block (one batch element)
    w_ref   : (Cout, Ct)       1x1 conv weight with BN scale folded in (f32)
    b_ref   : (Cout, 1)        fused BN bias
    o_ref   : (1, Cout, H*W)   lane-dense output block (already NCHW, flattened)
    act_ref : (Ct, H*W) VMEM   activation matrix; each branch is one dense slab write
    """
    S = H * W
    P = max(pool_radii) if pool_radii else 0
    Hp = H + 2 * P

    x_flat = x_ref[0].astype(jnp.float32)                     # (C, S)

    # identity branch: one dense slab store (no per-row scatter)
    act_ref[0:C, :] = x_flat

    if pool_radii:
        # lane position (w coordinate) used by the horizontal boundary masks; hoisted.
        wpos = lax.broadcasted_iota(jnp.int32, (C, S), 1) % W

        # 1) shared horizontal pass (incremental across branch radii)
        rowmax = _row_max_incremental(x_flat, wpos, W, pool_radii)

        # 2) per-branch vertical pass with shift doubling on a vertically -inf padded
        #    copy (two small constant strips instead of a full padded-image refill).
        vfill = jnp.full((C, P * W), _NEG_INF, jnp.float32)
        for bi, r in enumerate(pool_radii):
            vp = jnp.concatenate([vfill, rowmax[r], vfill], axis=1)    # (C, Hp*W)
            cache = {0: vp}
            vr = _col_max_doubling(cache, W, Hp, r)                    # (C, (Hp-2r)*W)
            branch = vr[:, (P - r) * W:(P - r) * W + S]                # rows [P, P+H)
            act_ref[(bi + 1) * C:(bi + 2) * C, :] = branch             # one slab write

    # 3) channel-concat + 1x1 conv as ONE matmul; single hoisted bias + swish epilogue.
    acc = jnp.dot(w_ref[...], act_ref[...],
                  preferred_element_type=jnp.float32)                  # (Cout, S)
    y = acc + b_ref[...]
    o_ref[0] = (y * jax.nn.sigmoid(y)).astype(o_ref.dtype)             # swish


# -------------------------------- JAX wrapper ------------------------------- #

def spp_forward(x_nchw, weight, gamma, beta, running_mean, running_var,
                pool_sizes=(5, 9, 13), eps=1e-5):
    """SPP forward. x_nchw: (N, C, H, W). weight: (Cout, C*(1+len(pool_sizes)), 1, 1)."""
    N, C, H, W = x_nchw.shape
    Cout = weight.shape[0]
    n_branch = 1 + len(pool_sizes)
    Ct = C * n_branch
    S = H * W
    assert weight.shape == (Cout, Ct, 1, 1), "SPP expects a 1x1 fuse conv"
    assert all(s % 2 == 1 for s in pool_sizes), "stride-1 'same' pooling needs odd sizes"
    radii = tuple(int(s) // 2 for s in pool_sizes)

    # Lane-dense input: free contiguous reshape, no transposes, already NCHW order.
    x_flat = x_nchw.astype(jnp.float32).reshape(N, C, S)

    # Fold eval-mode BatchNorm: scale into the 1x1 weight (kept in f32), bias for the
    # single in-kernel epilogue.
    scale = (gamma / jnp.sqrt(running_var + eps)).astype(jnp.float32)      # (Cout,)
    bias = (beta - running_mean * scale).astype(jnp.float32)               # (Cout,)
    w2d = weight[:, :, 0, 0].astype(jnp.float32) * scale[:, None]          # (Cout, Ct)

    kernel = functools.partial(_spp_kernel, H=H, W=W, C=C, pool_radii=radii)

    # VMEM limit from the actual footprint (+ headroom) instead of a blanket 32 MiB.
    bytes_f32 = 4
    block_bytes = (C * S + Cout * Ct + Cout + Cout * S) * bytes_f32  # one copy of each
    footprint = 2 * block_bytes + Ct * S * bytes_f32                 # dbl-buffer + scratch
    vmem_limit = int(min(64 * 1024 * 1024, footprint + 8 * 1024 * 1024))

    out = pl.pallas_call(
        kernel,
        out_shape=jax.ShapeDtypeStruct((N, Cout, S), jnp.float32),
        grid_spec=pltpu.PrefetchScalarGridSpec(
            num_scalar_prefetch=0,
            grid=(N,),
            in_specs=[
                pl.BlockSpec((1, C, S), lambda n: (n, 0, 0)),
                pl.BlockSpec((Cout, Ct), lambda n: (0, 0)),
                pl.BlockSpec((Cout, 1), lambda n: (0, 0)),
            ],
            out_specs=pl.BlockSpec((1, Cout, S), lambda n: (n, 0, 0)),
            scratch_shapes=[
                pltpu.VMEM((Ct, S), jnp.float32),   # lane-dense activation matrix
            ],
        ),
        compiler_params=pltpu.CompilerParams(
            dimension_semantics=("parallel",),      # N=2 -> both v7x TCs busy
            vmem_limit_bytes=vmem_limit,
        ),
    )(x_flat, w2d, bias[:, None])

    # (N, Cout, H*W) -> (N, Cout, H, W): contiguous reshape, already NCHW.
    return out.reshape(N, Cout, H, W)


# ----------------------------- Pure-JAX reference --------------------------- #

def spp_reference(x_nchw, weight, gamma, beta, running_mean, running_var,
                  pool_sizes=(5, 9, 13), eps=1e-5):
    x = x_nchw.astype(jnp.float32)
    outs = [x]
    for s in pool_sizes:
        p = s // 2
        pooled = lax.reduce_window(
            x, -jnp.inf, lax.max,
            window_dimensions=(1, 1, s, s),
            window_strides=(1, 1, 1, 1),
            padding=[(0, 0), (0, 0), (p, p), (p, p)])
        outs.append(pooled)
    y = jnp.concatenate(outs, axis=1)
    z = jnp.einsum('nchw,oc->nohw', y, weight[:, :, 0, 0].astype(jnp.float32))
    scale = gamma / jnp.sqrt(running_var + eps)
    bias = beta - running_mean * scale
    z = z * scale[None, :, None, None] + bias[None, :, None, None]
    return z * jax.nn.sigmoid(z)


# ------------------------------------ main ---------------------------------- #

if __name__ == "__main__":
    key = jax.random.PRNGKey(0)
    k_x, k_w, k_g, k_b, k_m, k_v = jax.random.split(key, 6)

    N, C, H, W = 2, 4, 16, 16
    pool_sizes = (5, 9, 13)
    Cout = 8
    Ct = C * (1 + len(pool_sizes))        # 16

    x = jax.random.normal(k_x, (N, C, H, W), jnp.float32)
    weight = jax.random.normal(k_w, (Cout, Ct, 1, 1), jnp.float32) * 0.1
    gamma = 1.0 + 0.1 * jax.random.normal(k_g, (Cout,), jnp.float32)
    beta = 0.1 * jax.random.normal(k_b, (Cout,), jnp.float32)
    running_mean = 0.1 * jax.random.normal(k_m, (Cout,), jnp.float32)
    running_var = 1.0 + 0.1 * jnp.abs(jax.random.normal(k_v, (Cout,), jnp.float32))

    out = spp_forward(x, weight, gamma, beta, running_mean, running_var,
                      pool_sizes=pool_sizes)
    out = jax.block_until_ready(out)

    ref = spp_reference(x, weight, gamma, beta, running_mean, running_var,
                        pool_sizes=pool_sizes)
    ref = jax.block_until_ready(ref)

    assert out.shape == (N, Cout, H, W), out.shape
    assert jnp.allclose(out, ref, rtol=1e-4, atol=1e-4), \
        float(jnp.max(jnp.abs(out - ref)))

    print("KERNEL_OK")
</pallas_src>

<mosaic_0001>
module attributes {stable_mosaic.version = 11 : i64} {
  func.func @_spp_kernel(%arg0: i32, %arg1: memref<1x4x256xf32, #tpu.memory_space<vmem>>, %arg2: memref<8x16xf32, #tpu.memory_space<vmem>>, %arg3: memref<8x1xf32, #tpu.memory_space<vmem>>, %arg4: memref<1x8x256xf32, #tpu.memory_space<vmem>>, %arg5: memref<16x256xf32, #tpu.memory_space<vmem>>) attributes {dimension_semantics = [#tpu.dimension_semantics<parallel>], iteration_bounds = array<i64: 2>, scalar_prefetch = 0 : i64, scratch_operands = 1 : i64, tpu.core_type = #tpu.core_type<tc>, window_params = [{transform_indices = @transform_0, window_bounds = array<i64: 1, 4, 256>}, {pipeline_mode = #tpu.pipeline_mode<synchronous>, transform_indices = @transform_1, window_bounds = array<i64: 8, 16>}, {pipeline_mode = #tpu.pipeline_mode<synchronous>, transform_indices = @transform_2, window_bounds = array<i64: 8, 1>}, {transform_indices = @transform_3, window_bounds = array<i64: 1, 8, 256>}]} {
    %c0 = arith.constant 0 : index
    %c0_0 = arith.constant 0 : index
    %c0_1 = arith.constant 0 : index
    %0 = vector.load %arg1[%c0, %c0_0, %c0_1] : memref<1x4x256xf32, #tpu.memory_space<vmem>>, vector<1x4x256xf32>
    %1 = vector.shape_cast %0 : vector<1x4x256xf32> to vector<4x256xf32>
    %c0_2 = arith.constant 0 : index
    %c0_3 = arith.constant 0 : index
    %2 = vector.load %arg5[%c0_2, %c0_3] : memref<16x256xf32, #tpu.memory_space<vmem>>, vector<4x256xf32>
    tpu.vector_store %arg5[%c0_2, %c0_3], %1 {strides = array<i32>} : memref<16x256xf32, #tpu.memory_space<vmem>>, vector<4x256xf32>,
    %3 = tpu.iota {dimensions = array<i32: 1>} : vector<4x256xi32>
    %c16_i32 = arith.constant 16 : i32
    %c0_i32 = arith.constant 0 : i32
    %4 = arith.cmpi eq, %c16_i32, %c0_i32 : i32
    %c1_i32 = arith.constant 1 : i32
    %5 = arith.select %4, %c1_i32, %c16_i32 : i32
    %6 = vector.broadcast %5 : i32 to vector<4x256xi32>
    %7 = arith.remsi %3, %6 : vector<4x256xi32>
    %c0_i32_4 = arith.constant 0 : i32
    %8 = vector.broadcast %c0_i32_4 : i32 to vector<4x256xi32>
    %9 = arith.cmpi ne, %7, %8 : vector<4x256xi32>
    %c0_i32_5 = arith.constant 0 : i32
    %10 = vector.broadcast %c0_i32_5 : i32 to vector<4x256xi32>
    %11 = arith.cmpi slt, %7, %10 : vector<4x256xi32>
    %c0_i32_6 = arith.constant 0 : i32
    %12 = arith.cmpi slt, %5, %c0_i32_6 : i32
    %13 = vector.broadcast %12 : i1 to vector<4x256xi1>
    %14 = vector.broadcast %13 : vector<4x256xi1> to vector<4x256xi1>
    %15 = arith.xori %11, %14 : vector<4x256xi1>
    %16 = arith.andi %15, %9 : vector<4x256xi1>
    %17 = vector.broadcast %5 : i32 to vector<4x256xi32>
    %18 = arith.addi %7, %17 : vector<4x256xi32>
    %19 = arith.select %16, %18, %7 : vector<4x256xi1>, vector<4x256xi32>
    %cst = arith.constant 0xFF800000 : f32
    %20 = vector.broadcast %cst : f32 to vector<4x1xf32>
    %21 = vector.extract_strided_slice %1 {offsets = [0, 1], sizes = [4, 255], strides = [1, 1]} : vector<4x256xf32> to vector<4x255xf32>
    %22 = tpu.concatenate %21, %20 in 1 : vector<4x255xf32>, vector<4x1xf32> -> vector<4x256xf32>
    %23 = vector.extract_strided_slice %1 {offsets = [0, 0], sizes = [4, 255], strides = [1, 1]} : vector<4x256xf32> to vector<4x255xf32>
    %24 = tpu.concatenate %20, %23 in 1 : vector<4x1xf32>, vector<4x255xf32> -> vector<4x256xf32>
    %c15_i32 = arith.constant 15 : i32
    %25 = vector.broadcast %c15_i32 : i32 to vector<4x256xi32>
    %26 = arith.cmpi slt, %19, %25 : vector<4x256xi32>
    %cst_7 = arith.constant 0xFF800000 : f32
    %27 = vector.broadcast %cst_7 : f32 to vector<4x256xf32>
    %28 = arith.select %26, %22, %27 : vector<4x256xi1>, vector<4x256xf32>
    %29 = arith.maximumf %1, %28 : vector<4x256xf32>
    %c1_i32_8 = arith.constant 1 : i32
    %30 = vector.broadcast %c1_i32_8 : i32 to vector<4x256xi32>
    %31 = arith.cmpi sge, %19, %30 : vector<4x256xi32>
    %cst_9 = arith.constant 0xFF800000 : f32
    %32 = vector.broadcast %cst_9 : f32 to vector<4x256xf32>
    %33 = arith.select %31, %24, %32 : vector<4x256xi1>, vector<4x256xf32>
    %34 = arith.maximumf %29, %33 : vector<4x256xf32>
    %cst_10 = arith.constant 0xFF800000 : f32
    %35 = vector.broadcast %cst_10 : f32 to vector<4x2xf32>
    %36 = vector.extract_strided_slice %1 {offsets = [0, 2], sizes = [4, 254], strides = [1, 1]} : vector<4x256xf32> to vector<4x254xf32>
    %37 = tpu.concatenate %36, %35 in 1 : vector<4x254xf32>, vector<4x2xf32> -> vector<4x256xf32>
    %38 = vector.extract_strided_slice %1 {offsets = [0, 0], sizes = [4, 254], strides = [1, 1]} : vector<4x256xf32> to vector<4x254xf32>
    %39 = tpu.concatenate %35, %38 in 1 : vector<4x2xf32>, vector<4x254xf32> -> vector<4x256xf32>
    %c14_i32 = arith.constant 14 : i32
    %40 = vector.broadcast %c14_i32 : i32 to vector<4x256xi32>
    %41 = arith.cmpi slt, %19, %40 : vector<4x256xi32>
    %cst_11 = arith.constant 0xFF800000 : f32
    %42 = vector.broadcast %cst_11 : f32 to vector<4x256xf32>
    %43 = arith.select %41, %37, %42 : vector<4x256xi1>, vector<4x256xf32>
    %44 = arith.maximumf %34, %43 : vector<4x256xf32>
    %c2_i32 = arith.constant 2 : i32
    %45 = vector.broadcast %c2_i32 : i32 to vector<4x256xi32>
    %46 = arith.cmpi sge, %19, %45 : vector<4x256xi32>
    %cst_12 = arith.constant 0xFF800000 : f32
    %47 = vector.broadcast %cst_12 : f32 to vector<4x256xf32>
    %48 = arith.select %46, %39, %47 : vector<4x256xi1>, vector<4x256xf32>
    %49 = arith.maximumf %44, %48 : vector<4x256xf32>
    %cst_13 = arith.constant 0xFF800000 : f32
    %50 = vector.broadcast %cst_13 : f32 to vector<4x3xf32>
    %51 = vector.extract_strided_slice %1 {offsets = [0, 3], sizes = [4, 253], strides = [1, 1]} : vector<4x256xf32> to vector<4x253xf32>
    %52 = tpu.concatenate %51, %50 in 1 : vector<4x253xf32>, vector<4x3xf32> -> vector<4x256xf32>
    %53 = vector.extract_strided_slice %1 {offsets = [0, 0], sizes = [4, 253], strides = [1, 1]} : vector<4x256xf32> to vector<4x253xf32>
    %54 = tpu.concatenate %50, %53 in 1 : vector<4x3xf32>, vector<4x253xf32> -> vector<4x256xf32>
    %c13_i32 = arith.constant 13 : i32
    %55 = vector.broadcast %c13_i32 : i32 to vector<4x256xi32>
    %56 = arith.cmpi slt, %19, %55 : vector<4x256xi32>
    %cst_14 = arith.constant 0xFF800000 : f32
    %57 = vector.broadcast %cst_14 : f32 to vector<4x256xf32>
    %58 = arith.select %56, %52, %57 : vector<4x256xi1>, vector<4x256xf32>
    %59 = arith.maximumf %49, %58 : vector<4x256xf32>
    %c3_i32 = arith.constant 3 : i32
    %60 = vector.broadcast %c3_i32 : i32 to vector<4x256xi32>
    %61 = arith.cmpi sge, %19, %60 : vector<4x256xi32>
    %cst_15 = arith.constant 0xFF800000 : f32
    %62 = vector.broadcast %cst_15 : f32 to vector<4x256xf32>
    %63 = arith.select %61, %54, %62 : vector<4x256xi1>, vector<4x256xf32>
    %64 = arith.maximumf %59, %63 : vector<4x256xf32>
    %cst_16 = arith.constant 0xFF800000 : f32
    %65 = vector.broadcast %cst_16 : f32 to vector<4x4xf32>
    %66 = vector.extract_strided_slice %1 {offsets = [0, 4], sizes = [4, 252], strides = [1, 1]} : vector<4x256xf32> to vector<4x252xf32>
    %67 = tpu.concatenate %66, %65 in 1 : vector<4x252xf32>, vector<4x4xf32> -> vector<4x256xf32>
    %68 = vector.extract_strided_slice %1 {offsets = [0, 0], sizes = [4, 252], strides = [1, 1]} : vector<4x256xf32> to vector<4x252xf32>
    %69 = tpu.concatenate %65, %68 in 1 : vector<4x4xf32>, vector<4x252xf32> -> vector<4x256xf32>
    %c12_i32 = arith.constant 12 : i32
    %70 = vector.broadcast %c12_i32 : i32 to vector<4x256xi32>
    %71 = arith.cmpi slt, %19, %70 : vector<4x256xi32>
    %cst_17 = arith.constant 0xFF800000 : f32
    %72 = vector.broadcast %cst_17 : f32 to vector<4x256xf32>
    %73 = arith.select %71, %67, %72 : vector<4x256xi1>, vector<4x256xf32>
    %74 = arith.maximumf %64, %73 : vector<4x256xf32>
    %c4_i32 = arith.constant 4 : i32
    %75 = vector.broadcast %c4_i32 : i32 to vector<4x256xi32>
    %76 = arith.cmpi sge, %19, %75 : vector<4x256xi32>
    %cst_18 = arith.constant 0xFF800000 : f32
    %77 = vector.broadcast %cst_18 : f32 to vector<4x256xf32>
    %78 = arith.select %76, %69, %77 : vector<4x256xi1>, vector<4x256xf32>
    %79 = arith.maximumf %74, %78 : vector<4x256xf32>
    %cst_19 = arith.constant 0xFF800000 : f32
    %80 = vector.broadcast %cst_19 : f32 to vector<4x5xf32>
    %81 = vector.extract_strided_slice %1 {offsets = [0, 5], sizes = [4, 251], strides = [1, 1]} : vector<4x256xf32> to vector<4x251xf32>
    %82 = tpu.concatenate %81, %80 in 1 : vector<4x251xf32>, vector<4x5xf32> -> vector<4x256xf32>
    %83 = vector.extract_strided_slice %1 {offsets = [0, 0], sizes = [4, 251], strides = [1, 1]} : vector<4x256xf32> to vector<4x251xf32>
    %84 = tpu.concatenate %80, %83 in 1 : vector<4x5xf32>, vector<4x251xf32> -> vector<4x256xf32>
    %c11_i32 = arith.constant 11 : i32
    %85 = vector.broadcast %c11_i32 : i32 to vector<4x256xi32>
    %86 = arith.cmpi slt, %19, %85 : vector<4x256xi32>
    %cst_20 = arith.constant 0xFF800000 : f32
    %87 = vector.broadcast %cst_20 : f32 to vector<4x256xf32>
    %88 = arith.select %86, %82, %87 : vector<4x256xi1>, vector<4x256xf32>
    %89 = arith.maximumf %79, %88 : vector<4x256xf32>
    %c5_i32 = arith.constant 5 : i32
    %90 = vector.broadcast %c5_i32 : i32 to vector<4x256xi32>
    %91 = arith.cmpi sge, %19, %90 : vector<4x256xi32>
    %cst_21 = arith.constant 0xFF800000 : f32
    %92 = vector.broadcast %cst_21 : f32 to vector<4x256xf32>
    %93 = arith.select %91, %84, %92 : vector<4x256xi1>, vector<4x256xf32>
    %94 = arith.maximumf %89, %93 : vector<4x256xf32>
    %cst_22 = arith.constant 0xFF800000 : f32
    %95 = vector.broadcast %cst_22 : f32 to vector<4x6xf32>
    %96 = vector.extract_strided_slice %1 {offsets = [0, 6], sizes = [4, 250], strides = [1, 1]} : vector<4x256xf32> to vector<4x250xf32>
    %97 = tpu.concatenate %96, %95 in 1 : vector<4x250xf32>, vector<4x6xf32> -> vector<4x256xf32>
    %98 = vector.extract_strided_slice %1 {offsets = [0, 0], sizes = [4, 250], strides = [1, 1]} : vector<4x256xf32> to vector<4x250xf32>
    %99 = tpu.concatenate %95, %98 in 1 : vector<4x6xf32>, vector<4x250xf32> -> vector<4x256xf32>
    %c10_i32 = arith.constant 10 : i32
    %100 = vector.broadcast %c10_i32 : i32 to vector<4x256xi32>
    %101 = arith.cmpi slt, %19, %100 : vector<4x256xi32>
    %cst_23 = arith.constant 0xFF800000 : f32
    %102 = vector.broadcast %cst_23 : f32 to vector<4x256xf32>
    %103 = arith.select %101, %97, %102 : vector<4x256xi1>, vector<4x256xf32>
    %104 = arith.maximumf %94, %103 : vector<4x256xf32>
    %c6_i32 = arith.constant 6 : i32
    %105 = vector.broadcast %c6_i32 : i32 to vector<4x256xi32>
    %106 = arith.cmpi sge, %19, %105 : vector<4x256xi32>
    %cst_24 = arith.constant 0xFF800000 : f32
    %107 = vector.broadcast %cst_24 : f32 to vector<4x256xf32>
    %108 = arith.select %106, %99, %107 : vector<4x256xi1>, vector<4x256xf32>
    %109 = arith.maximumf %104, %108 : vector<4x256xf32>
    %cst_25 = arith.constant 0xFF800000 : f32
    %110 = vector.broadcast %cst_25 : f32 to vector<4x96xf32>
    %111 = tpu.concatenate %110, %49, %110 in 1 : vector<4x96xf32>, vector<4x256xf32>, vector<4x96xf32> -> vector<4x448xf32>
    %112 = vector.extract_strided_slice %111 {offsets = [0, 0], sizes = [4, 416], strides = [1, 1]} : vector<4x448xf32> to vector<4x416xf32>
    %113 = vector.extract_strided_slice %111 {offsets = [0, 32], sizes = [4, 416], strides = [1, 1]} : vector<4x448xf32> to vector<4x416xf32>
    %114 = arith.maximumf %112, %113 : vector<4x416xf32>
    %115 = vector.extract_strided_slice %111 {offsets = [0, 16], sizes = [4, 416], strides = [1, 1]} : vector<4x448xf32> to vector<4x416xf32>
    %116 = arith.maximumf %114, %115 : vector<4x416xf32>
    %117 = vector.extract_strided_slice %116 {offsets = [0, 0], sizes = [4, 384], strides = [1, 1]} : vector<4x416xf32> to vector<4x384xf32>
    %118 = vector.extract_strided_slice %116 {offsets = [0, 32], sizes = [4, 384], strides = [1, 1]} : vector<4x416xf32> to vector<4x384xf32>
    %119 = arith.maximumf %117, %118 : vector<4x384xf32>
    %120 = vector.extract_strided_slice %119 {offsets = [0, 64], sizes = [4, 256], strides = [1, 1]} : vector<4x384xf32> to vector<4x256xf32>
    %c4 = arith.constant 4 : index
    %c0_26 = arith.constant 0 : index
    %121 = vector.load %arg5[%c4, %c0_26] : memref<16x256xf32, #tpu.memory_space<vmem>>, vector<4x256xf32>
    tpu.vector_store %arg5[%c4, %c0_26], %120 {strides = array<i32>} : memref<16x256xf32, #tpu.memory_space<vmem>>, vector<4x256xf32>,
    %122 = tpu.concatenate %110, %79, %110 in 1 : vector<4x96xf32>, vector<4x256xf32>, vector<4x96xf32> -> vector<4x448xf32>
    %123 = vector.extract_strided_slice %122 {offsets = [0, 0], sizes = [4, 416], strides = [1, 1]} : vector<4x448xf32> to vector<4x416xf32>
    %124 = vector.extract_strided_slice %122 {offsets = [0, 32], sizes = [4, 416], strides = [1, 1]} : vector<4x448xf32> to vector<4x416xf32>
    %125 = arith.maximumf %123, %124 : vector<4x416xf32>
    %126 = vector.extract_strided_slice %122 {offsets = [0, 16], sizes = [4, 416], strides = [1, 1]} : vector<4x448xf32> to vector<4x416xf32>
    %127 = arith.maximumf %125, %126 : vector<4x416xf32>
    %128 = vector.extract_strided_slice %127 {offsets = [0, 0], sizes = [4, 352], strides = [1, 1]} : vector<4x416xf32> to vector<4x352xf32>
    %129 = vector.extract_strided_slice %127 {offsets = [0, 64], sizes = [4, 352], strides = [1, 1]} : vector<4x416xf32> to vector<4x352xf32>
    %130 = arith.maximumf %128, %129 : vector<4x352xf32>
    %131 = vector.extract_strided_slice %127 {offsets = [0, 32], sizes = [4, 352], strides = [1, 1]} : vector<4x416xf32> to vector<4x352xf32>
    %132 = arith.maximumf %130, %131 : vector<4x352xf32>
    %133 = vector.extract_strided_slice %132 {offsets = [0, 0], sizes = [4, 320], strides = [1, 1]} : vector<4x352xf32> to vector<4x320xf32>
    %134 = vector.extract_strided_slice %132 {offsets = [0, 32], sizes = [4, 320], strides = [1, 1]} : vector<4x352xf32> to vector<4x320xf32>
    %135 = arith.maximumf %133, %134 : vector<4x320xf32>
    %136 = vector.extract_strided_slice %135 {offsets = [0, 32], sizes = [4, 256], strides = [1, 1]} : vector<4x320xf32> to vector<4x256xf32>
    %c8 = arith.constant 8 : index
    %c0_27 = arith.constant 0 : index
    %137 = vector.load %arg5[%c8, %c0_27] : memref<16x256xf32, #tpu.memory_space<vmem>>, vector<4x256xf32>
    tpu.vector_store %arg5[%c8, %c0_27], %136 {strides = array<i32>} : memref<16x256xf32, #tpu.memory_space<vmem>>, vector<4x256xf32>,
    %138 = tpu.concatenate %110, %109, %110 in 1 : vector<4x96xf32>, vector<4x256xf32>, vector<4x96xf32> -> vector<4x448xf32>
    %139 = vector.extract_strided_slice %138 {offsets = [0, 0], sizes = [4, 416], strides = [1, 1]} : vector<4x448xf32> to vector<4x416xf32>
    %140 = vector.extract_strided_slice %138 {offsets = [0, 32], sizes = [4, 416], strides = [1, 1]} : vector<4x448xf32> to vector<4x416xf32>
    %141 = arith.maximumf %139, %140 : vector<4x416xf32>
    %142 = vector.extract_strided_slice %138 {offsets = [0, 16], sizes = [4, 416], strides = [1, 1]} : vector<4x448xf32> to vector<4x416xf32>
    %143 = arith.maximumf %141, %142 : vector<4x416xf32>
    %144 = vector.extract_strided_slice %143 {offsets = [0, 0], sizes = [4, 352], strides = [1, 1]} : vector<4x416xf32> to vector<4x352xf32>
    %145 = vector.extract_strided_slice %143 {offsets = [0, 64], sizes = [4, 352], strides = [1, 1]} : vector<4x416xf32> to vector<4x352xf32>
    %146 = arith.maximumf %144, %145 : vector<4x352xf32>
    %147 = vector.extract_strided_slice %143 {offsets = [0, 32], sizes = [4, 352], strides = [1, 1]} : vector<4x416xf32> to vector<4x352xf32>
    %148 = arith.maximumf %146, %147 : vector<4x352xf32>
    %149 = vector.extract_strided_slice %148 {offsets = [0, 0], sizes = [4, 256], strides = [1, 1]} : vector<4x352xf32> to vector<4x256xf32>
    %150 = vector.extract_strided_slice %148 {offsets = [0, 96], sizes = [4, 256], strides = [1, 1]} : vector<4x352xf32> to vector<4x256xf32>
    %151 = arith.maximumf %149, %150 : vector<4x256xf32>
    %c12 = arith.constant 12 : index
    %c0_28 = arith.constant 0 : index
    %152 = vector.load %arg5[%c12, %c0_28] : memref<16x256xf32, #tpu.memory_space<vmem>>, vector<4x256xf32>
    tpu.vector_store %arg5[%c12, %c0_28], %151 {strides = array<i32>} : memref<16x256xf32, #tpu.memory_space<vmem>>, vector<4x256xf32>,
    %c0_29 = arith.constant 0 : index
    %c0_30 = arith.constant 0 : index
    %153 = vector.load %arg2[%c0_29, %c0_30] : memref<8x16xf32, #tpu.memory_space<vmem>>, vector<8x16xf32>
    %c0_31 = arith.constant 0 : index
    %c0_32 = arith.constant 0 : index
    %154 = vector.load %arg5[%c0_31, %c0_32] : memref<16x256xf32, #tpu.memory_space<vmem>>, vector<16x256xf32>
    %cst_33 = arith.constant dense<0.000000e+00> : vector<8x256xf32>
    %155 = tpu.matmul %153, %154, %cst_33 {dimension_numbers = #tpu.dot_dimension_numbers<[1], [0], [0], [1], [0, 0, 1, 1], [], []>} : vector<8x16xf32>, vector<16x256xf32>, vector<8x256xf32> -> vector<8x256xf32>
    %c0_34 = arith.constant 0 : index
    %c0_35 = arith.constant 0 : index
    %156 = vector.load %arg3[%c0_34, %c0_35] : memref<8x1xf32, #tpu.memory_space<vmem>>, vector<8x1xf32>
    %157 = vector.broadcast %156 : vector<8x1xf32> to vector<8x256xf32>
    %158 = arith.addf %155, %157 : vector<8x256xf32>
    %159 = arith.negf %158 : vector<8x256xf32>
    %160 = math.exp %159 : vector<8x256xf32>
    %cst_36 = arith.constant 1.000000e+00 : f32
    %161 = vector.broadcast %cst_36 : f32 to vector<8x256xf32>
    %162 = arith.addf %161, %160 : vector<8x256xf32>
    %163 = arith.divf %161, %162 : vector<8x256xf32>
    %164 = arith.mulf %158, %163 : vector<8x256xf32>
    %c0_37 = arith.constant 0 : index
    %c0_38 = arith.constant 0 : index
    %c0_39 = arith.constant 0 : index
    %165 = vector.load %arg4[%c0_37, %c0_38, %c0_39] : memref<1x8x256xf32, #tpu.memory_space<vmem>>, vector<1x8x256xf32>
    %166 = vector.shape_cast %165 : vector<1x8x256xf32> to vector<8x256xf32>
    %167 = vector.shape_cast %164 : vector<8x256xf32> to vector<1x8x256xf32>
    tpu.vector_store %arg4[%c0_37, %c0_38, %c0_39], %167 {strides = array<i32>} : memref<1x8x256xf32, #tpu.memory_space<vmem>>, vector<1x8x256xf32>,
    return
  }
  func.func @transform_0(%arg0: i32) -> (i32, i32, i32) {
    %c0_i32 = arith.constant 0 : i32
    %c0_i32_0 = arith.constant 0 : i32
    %c0_i32_1 = arith.constant 0 : i32
    return %arg0, %c0_i32, %c0_i32_0 : i32, i32, i32
  }
  func.func @transform_1(%arg0: i32) -> (i32, i32) {
    %c0_i32 = arith.constant 0 : i32
    %c0_i32_0 = arith.constant 0 : i32
    %c0_i32_1 = arith.constant 0 : i32
    return %c0_i32, %c0_i32_0 : i32, i32
  }
  func.func @transform_2(%arg0: i32) -> (i32, i32) {
    %c0_i32 = arith.constant 0 : i32
    %c0_i32_0 = arith.constant 0 : i32
    %c0_i32_1 = arith.constant 0 : i32
    return %c0_i32, %c0_i32_0 : i32, i32
  }
  func.func @transform_3(%arg0: i32) -> (i32, i32, i32) {
    %c0_i32 = arith.constant 0 : i32
    %c0_i32_0 = arith.constant 0 : i32
    %c0_i32_1 = arith.constant 0 : i32
    return %arg0, %c0_i32, %c0_i32_0 : i32, i32, i32
  }
}

</mosaic_0001>

<llo_original>
// kernel: tpu_custom_call.1
$region0: #{tpu_custom_call.1}
  #allocation0 [shape = 'u32[]', space=smem, size = 0x4, offset = 0x4, fixed_abs, tag = 'smem constant byte address 0x4 - core index']
  #allocation1 [shape = 'u32[144,128]{1,0:T(1,128)}', space=vmem, size = 0x12000, scoped, tag = 'internal scratch']
  #allocation2 [shape = 'f32[16,256]{1,0:T(8,128)}', space=vmem, size = 0x4000, scoped, tag = 'scratch operand']
  %s0 = inlined_call_operand.hbm [shape: f32[2,4,256], index: 0, kind: input, shape index: {}]
  %s1 = inlined_call_operand.vmem [shape: f32[8,16], index: 1, kind: input, shape index: {}]
  %s2 = inlined_call_operand.vmem [shape: f32[8,1], index: 2, kind: input, shape index: {}]
  %s3 = inlined_call_operand.hbm [shape: f32[2,8,256], index: 3, kind: output, shape index: {}]
  %s4 = sld [smem:[#allocation0]]
  $region49: #{tpu_custom_call.1} parent=0
    _
  %s6 = ssub.s32 1, %s4
  %s7 = scalar_select 0, %s6, %s4
  $region1: #{tpu_custom_call.1} parent=0
    #allocation3 [shape = 'u8[8192]{0}', space=vmem, size = 0x2000, scoped, tag = 'input window, operand 0']
    #allocation4 [shape = 's32[2]{0}', space=sflag, size = 0x8, scoped, tag = 'scoped memory for tpu_custom_call.1']
    #allocation5 [shape = 's32[2]{0}', space=sflag, size = 0x8, scoped, tag = 'scoped memory for tpu_custom_call.1']
    #allocation6 [shape = 'u8[16384]{0}', space=vmem, size = 0x4000, scoped, tag = 'output window, operand 0']
    %8 = vsyncpa [#allocation4], 0
    %s9 = scalar_lea.sflag [#allocation4], 1
    %10 = vsyncpa %s9, 0
    %11 = vsyncpa [#allocation5], 0
    %s12 = scalar_lea.sflag [#allocation5], 1
    %13 = vsyncpa %s12, 0
    loop: start=0, step=1, limit=4
    $region2: #{tpu_custom_call.1} parent=1 // loop_pre_header
      _
    $region3: #{tpu_custom_call.1} parent=1 // loop_header
      %s15 = sphi 0, %s19
      %p16 = scmp.ge.s32.totalorder %s15, 4
      %s25 = sphi 0, %s27
      %s28 = sphi 0, %s25
      %s29 = sphi 0, %s28
      %s45 = sphi 0, %s29
      %s49 = sphi 0, %s49
      %s51 = sphi 0, %s49
      %s52 = sphi 0, %s51
      %s66 = sphi 0, %s52
      %s70 = sphi 0, %s70
      %s72 = sphi 0, %s70
      %s73 = sphi 0, %s72
      %s87 = sphi 0, %s73
      %s93 = sphi 0, %s95
      %s96 = sphi 0, %s93
      %s97 = sphi 0, %s96
      %s113 = sphi 0, %s97
    $region4: #{tpu_custom_call.1} parent=1 // loop_header_branch
      %18 = sbr.rel (%p16) target = $region8
    $region5: #{tpu_custom_call.1} parent=1 // loop_body
      %s20 = ssub.s32 %s15, 1
      %s21 = ssub.s32 %s15, 2
      %s22 = sadd.s32 %s15, 1
      %s23 = ssub.s32 %s15, %s22
      %p24 = scmp.eq.s32.totalorder %s23, 0
      %s26 = sadd.s32 %s25, 1
      %s27 = scalar_select %p24, %s25, %s26
      %p30 = pneg %p24
      %p31 = scmp.eq.s32.totalorder %s15, 1
      %p32 = por %p30, %p31
      %p33 = scmp.ne.s32.totalorder %s25, %s28
      %p34 = scmp.eq.s32.totalorder %s15, 0
      %p35 = por %p33, %p34
      %p36 = scmp.ne.s32.totalorder %s25, %s28
      %p37 = scmp.eq.s32.totalorder %s20, 1
      %p38 = por %p36, %p37
      %p39 = scmp.ne.s32.totalorder %s28, %s29
      %p40 = scmp.eq.s32.totalorder %s20, 0
      %p41 = por %p39, %p40
      %p42 = scmp.ne.s32.totalorder %s28, %s29
      %p43 = scmp.eq.s32.totalorder %s21, 1
      %p44 = por %p42, %p43
      %p46 = scmp.ne.s32.totalorder %s29, %s45
      %p47 = scmp.eq.s32.totalorder %s21, 0
      %p48 = por %p46, %p47
      %s50 = sadd.s32 %s49, 1
      %p53 = scmp.eq.s32.totalorder %s15, 1
      %p54 = scmp.ne.s32.totalorder %s49, %s51
      %p55 = scmp.eq.s32.totalorder %s15, 0
      %p56 = por %p54, %p55
      %p57 = scmp.ne.s32.totalorder %s49, %s51
      %p58 = scmp.eq.s32.totalorder %s20, 1
      %p59 = por %p57, %p58
      %p60 = scmp.ne.s32.totalorder %s51, %s52
      %p61 = scmp.eq.s32.totalorder %s20, 0
      %p62 = por %p60, %p61
      %p63 = scmp.ne.s32.totalorder %s51, %s52
      %p64 = scmp.eq.s32.totalorder %s21, 1
      %p65 = por %p63, %p64
      %p67 = scmp.ne.s32.totalorder %s52, %s66
      %p68 = scmp.eq.s32.totalorder %s21, 0
      %p69 = por %p67, %p68
      %s71 = sadd.s32 %s70, 1
      %p74 = scmp.eq.s32.totalorder %s15, 1
      %p75 = scmp.ne.s32.totalorder %s70, %s72
      %p76 = scmp.eq.s32.totalorder %s15, 0
      %p77 = por %p75, %p76
      %p78 = scmp.ne.s32.totalorder %s70, %s72
      %p79 = scmp.eq.s32.totalorder %s20, 1
      %p80 = por %p78, %p79
      %p81 = scmp.ne.s32.totalorder %s72, %s73
      %p82 = scmp.eq.s32.totalorder %s20, 0
      %p83 = por %p81, %p82
      %p84 = scmp.ne.s32.totalorder %s72, %s73
      %p85 = scmp.eq.s32.totalorder %s21, 1
      %p86 = por %p84, %p85
      %p88 = scmp.ne.s32.totalorder %s73, %s87
      %p89 = scmp.eq.s32.totalorder %s21, 0
      %p90 = por %p88, %p89
      %s91 = ssub.s32 %s15, %s22
      %p92 = scmp.eq.s32.totalorder %s91, 0
      %s94 = sadd.s32 %s93, 1
      %s95 = scalar_select %p92, %s93, %s94
      %p98 = pneg %p92
      %p99 = scmp.eq.s32.totalorder %s15, 1
      %p100 = por %p98, %p99
      %p101 = scmp.ne.s32.totalorder %s93, %s96
      %p102 = scmp.eq.s32.totalorder %s15, 0
      %p103 = por %p101, %p102
      %p104 = scmp.ne.s32.totalorder %s93, %s96
      %p105 = scmp.eq.s32.totalorder %s20, 1
      %p106 = por %p104, %p105
      %p107 = scmp.ne.s32.totalorder %s96, %s97
      %p108 = scmp.eq.s32.totalorder %s20, 0
      %p109 = por %p107, %p108
      %p110 = scmp.ne.s32.totalorder %s96, %s97
      %p111 = scmp.eq.s32.totalorder %s21, 1
      %p112 = por %p110, %p111
      %p114 = scmp.ne.s32.totalorder %s97, %s113
      %p115 = scmp.eq.s32.totalorder %s21, 0
      %p116 = por %p114, %p115
      %p117 = scmp.le.s32.totalorder 1, %s15
      %p118 = scmp.lt.s32.totalorder %s15, 3
      %p119 = pnand %p117, %p118
      %p120 = pneg %p119
      // Predicated region
      $region9: #{tpu_custom_call.1} parent=5 // pred_check
        _
      $region10: #{tpu_custom_call.1} parent=5 // pred_check_branch
        %122 = sbr.rel (%p119) target = $region12
      $region11: #{tpu_custom_call.1} parent=5 // pred_region
        %s123 = ssub.s32 %s15, 1
        // Predicated region
        $region13: #{tpu_custom_call.1} parent=11 // pred_check
          %p124 = pneg %p62
        $region14: #{tpu_custom_call.1} parent=11 // pred_check_branch
          %126 = sbr.rel (%p124) target = $region16
        $region15: #{tpu_custom_call.1} parent=11 // pred_region
          _
        $region16: #{tpu_custom_call.1} parent=11 // pred_fallthru
          _
        // Predicated region
        $region17: #{tpu_custom_call.1} parent=11 // pred_check
          %p127 = pneg %p83
        $region18: #{tpu_custom_call.1} parent=11 // pred_check_branch
          %129 = sbr.rel (%p127) target = $region20
        $region19: #{tpu_custom_call.1} parent=11 // pred_region
          _
        $region20: #{tpu_custom_call.1} parent=11 // pred_fallthru
          _
      $region12: #{tpu_custom_call.1} parent=5 // pred_fallthru
        _
      %p130 = scmp.lt.s32.totalorder %s15, 2
      // Predicated region
      $region21: #{tpu_custom_call.1} parent=5 // pred_check
        %p131 = pneg %p130
      $region22: #{tpu_custom_call.1} parent=5 // pred_check_branch
        %133 = sbr.rel (%p131) target = $region24
      $region23: #{tpu_custom_call.1} parent=5 // pred_region
        // Predicated region
        $region25: #{tpu_custom_call.1} parent=23 // pred_check
          %p134 = pneg %p35
        $region26: #{tpu_custom_call.1} parent=23 // pred_check_branch
          %136 = sbr.rel (%p134) target = $region28
        $region27: #{tpu_custom_call.1} parent=23 // pred_region
          %s137 = sand.u32 %s25, 1
          %s138 = scalar_lea.sflag [#allocation4], %s137
          %s139 = sand.u32 %s25, 1
          %s140 = smul.addr %s139, 8
          %s141 = scalar_lea.vmem [#allocation3], %s140
          %s143 = ssub.s32 128, 128
          %144 = vsyncadd %s138, %s143
          %s145 = smul.addr %s15, 2
          %s146 = smul.addr %s145, 64
          %s147 = scalar_lea.hbm %s0, %s146
          %s149 = sshll.u32 %s141, 4
          %s150 = int_to_ptr.vmem [resolvable:$true] %s149
          %152 = dma.hbm_to_vmem [thread:$0]  %s147, 128, %s150, %s138
        $region28: #{tpu_custom_call.1} parent=23 // pred_fallthru
          _
      $region24: #{tpu_custom_call.1} parent=5 // pred_fallthru
        _
      %p153 = scmp.le.s32.totalorder 1, %s15
      %p154 = scmp.lt.s32.totalorder %s15, 3
      %p155 = pnand %p153, %p154
      %p156 = pneg %p155
      // Predicated region
      $region29: #{tpu_custom_call.1} parent=5 // pred_check
        _
      $region30: #{tpu_custom_call.1} parent=5 // pred_check_branch
        %158 = sbr.rel (%p155) target = $region32
      $region31: #{tpu_custom_call.1} parent=5 // pred_region
        %s159 = ssub.s32 %s15, 1
        %s160 = sand.u32 %s28, 1
        %s161 = scalar_lea.sflag [#allocation4], %s160
        %s162 = sand.u32 %s28, 1
        %s163 = smul.addr %s162, 8
        %s164 = scalar_lea.vmem [#allocation3], %s163
        // Predicated region
        $region33: #{tpu_custom_call.1} parent=31 // pred_check
          %p165 = pneg %p41
        $region34: #{tpu_custom_call.1} parent=31 // pred_check_branch
          %167 = sbr.rel (%p165) target = $region36
        $region35: #{tpu_custom_call.1} parent=31 // pred_region
          %168 = dma.done %s161, 128
        $region36: #{tpu_custom_call.1} parent=31 // pred_fallthru
          _
        %s169 = sand.u32 %s28, 1
        %s170 = scalar_lea.sflag [#allocation4], %s169
        %s171 = sand.u32 %s28, 1
        %s172 = smul.addr %s171, 8
        %s173 = scalar_lea.vmem [#allocation3], %s172
        %p174 = pneg %p41
        %p175 = pneg %p38
        %p176 = pneg %p62
        %p177 = pneg %p59
        %p178 = pneg %p83
        %p179 = pneg %p80
        %p180 = pneg %p109
        %p181 = pneg %p106
        %s182 = sand.u32 %s96, 1
        %s183 = scalar_lea.sflag [#allocation5], %s182
        %s184 = sand.u32 %s96, 1
        %s185 = smul.addr %s184, 16
        %s186 = scalar_lea.vmem [#allocation6], %s185
        %v187 = vld [vmem:[%s164] sm:$0xff]
        %v189 = vcombine.high %v187, %v187
        %191 = vst [vmem:[#allocation2] sm:$0xf] %v187
        %192 = vst [vmem:[#allocation2 + $0x8] sm:$0xf] %v189
        %v193 = vlaneseq
        %v194 = vand.u32 %v193, 127
        %v195 = vadd.s32 %v194, 128
        %vm196 = vcmp.lt.s32.totalorder %v194, 0
        %v197 = vsub.s32 0, %v194
        %v198 = vsel %vm196, %v197, %v194
        %v199 = vshrl.u32 %v198, 4
        %v200 = vand.u32 %v198, 15
        %v201 = vsub.s32 0, %v200
        %v202 = vsel %vm196, %v201, %v200
        %vm203 = vcmp.lt.s32.totalorder %v195, 0
        %v204 = vsub.s32 0, %v195
        %v205 = vsel %vm203, %v204, %v195
        %v206 = vshrl.u32 %v205, 4
        %v207 = vand.u32 %v205, 15
        %v208 = vsub.s32 0, %v207
        %v209 = vsel %vm203, %v208, %v207
        %vm210 = vcmp.ne.s32.totalorder %v202, 0
        %vm211 = vcmp.ne.s32.totalorder %v209, 0
        %vm212 = vcmp.lt.s32.totalorder %v202, 0
        %vm213 = vcmp.lt.s32.totalorder %v209, 0
        %vm214 = vmand %vm212, %vm210
        %vm215 = vmand %vm213, %vm211
        %v216 = vadd.s32 %v202, 16
        %v217 = vadd.s32 %v209, 16
        %v218 = vsel %vm214, %v216, %v202
        %v219 = vsel %vm215, %v217, %v209
        %220 = vrot.lane.b32.xlu0 %v187, 127
        %v221 = vpop.permute.xlu0 %220
        %222 = vrot.lane.b32.xlu0 %v189, 127
        %v223 = vpop.permute.xlu0 %222
        %vm224 = vcmask 1039360
        %v225 = vsel %vm224, %v221, %v223
        %v228 = vsel %vm224, %v223, -inf
        %229 = vrot.lane.b32.xlu0 %v187, 1
        %v230 = vpop.permute.xlu0 %229
        %231 = vrot.lane.b32.xlu0 %v189, 1
        %v232 = vpop.permute.xlu0 %231
        %vm233 = vcmask 7168
        %v234 = vsel %vm233, %v230, %v232
        %v237 = vsel %vm233, -inf, %v230
        %vm238 = vcmp.lt.s32.totalorder %v218, 15
        %vm239 = vcmp.lt.s32.totalorder %v219, 15
        %v240 = vsel %vm238, %v225, -inf
        %v241 = vsel %vm239, %v228, -inf
        %v244 = vcombine.low %v240, %v241
        %v246 = vmax.f32 %v187, %v244
        %vm247 = vcmp.ge.s32.totalorder %v218, 1
        %vm248 = vcmp.ge.s32.totalorder %v219, 1
        %v249 = vsel %vm247, %v237, -inf
        %v250 = vsel %vm248, %v234, -inf
        %v253 = vcombine.low %v249, %v250
        %v255 = vmax.f32 %v246, %v253
        %256 = vrot.lane.b32.xlu0 %v187, 126
        %v257 = vpop.permute.xlu0 %256
        %258 = vrot.lane.b32.xlu0 %v189, 126
        %v259 = vpop.permute.xlu0 %258
        %vm260 = vcmask 1031168
        %v261 = vsel %vm260, %v257, %v259
        %v264 = vsel %vm260, %v259, -inf
        %265 = vrot.lane.b32.xlu0 %v187, 2
        %v266 = vpop.permute.xlu0 %265
        %267 = vrot.lane.b32.xlu0 %v189, 2
        %v268 = vpop.permute.xlu0 %267
        %vm269 = vcmask 15360
        %v270 = vsel %vm269, %v266, %v268
        %v273 = vsel %vm269, -inf, %v266
        %vm274 = vcmp.lt.s32.totalorder %v218, 14
        %vm275 = vcmp.lt.s32.totalorder %v219, 14
        %v276 = vsel %vm274, %v261, -inf
        %v277 = vsel %vm275, %v264, -inf
        %v280 = vcombine.low %v276, %v277
        %v282 = vmax.f32 %v255, %v280
        %vm283 = vcmp.ge.s32.totalorder %v218, 2
        %vm284 = vcmp.ge.s32.totalorder %v219, 2
        %v285 = vsel %vm283, %v273, -inf
        %v286 = vsel %vm284, %v270, -inf
        %v289 = vcombine.low %v285, %v286
        %v291 = vmax.f32 %v282, %v289
        %292 = vrot.lane.b32.xlu0 %v187, 125
        %v293 = vpop.permute.xlu0 %292
        %294 = vrot.lane.b32.xlu0 %v189, 125
        %v295 = vpop.permute.xlu0 %294
        %vm296 = vcmask 1022976
        %v297 = vsel %vm296, %v293, %v295
        %v300 = vsel %vm296, %v295, -inf
        %301 = vrot.lane.b32.xlu0 %v187, 3
        %v302 = vpop.permute.xlu0 %301
        %303 = vrot.lane.b32.xlu0 %v189, 3
        %v304 = vpop.permute.xlu0 %303
        %vm305 = vcmask 23552
        %v306 = vsel %vm305, %v302, %v304
        %v309 = vsel %vm305, -inf, %v302
        %vm310 = vcmp.lt.s32.totalorder %v218, 13
        %vm311 = vcmp.lt.s32.totalorder %v219, 13
        %v312 = vsel %vm310, %v297, -inf
        %v313 = vsel %vm311, %v300, -inf
        %v316 = vcombine.low %v312, %v313
        %v318 = vmax.f32 %v291, %v316
        %vm319 = vcmp.ge.s32.totalorder %v218, 3
        %vm320 = vcmp.ge.s32.totalorder %v219, 3
        %v321 = vsel %vm319, %v309, -inf
        %v322 = vsel %vm320, %v306, -inf
        %v325 = vcombine.low %v321, %v322
        %v327 = vmax.f32 %v318, %v325
        %328 = vrot.lane.b32.xlu0 %v187, 124
        %v329 = vpop.permute.xlu0 %328
        %330 = vrot.lane.b32.xlu0 %v189, 124
        %v331 = vpop.permute.xlu0 %330
        %vm332 = vcmask 1014784
        %v333 = vsel %vm332, %v329, %v331
        %v336 = vsel %vm332, %v331, -inf
        %337 = vrot.lane.b32.xlu0 %v187, 4
        %v338 = vpop.permute.xlu0 %337
        %339 = vrot.lane.b32.xlu0 %v189, 4
        %v340 = vpop.permute.xlu0 %339
        %vm341 = vcmask 31744
        %v342 = vsel %vm341, %v338, %v340
        %v345 = vsel %vm341, -inf, %v338
        %vm346 = vcmp.lt.s32.totalorder %v218, 12
        %vm347 = vcmp.lt.s32.totalorder %v219, 12
        %v348 = vsel %vm346, %v333, -inf
        %v349 = vsel %vm347, %v336, -inf
        %v352 = vcombine.low %v348, %v349
        %v354 = vmax.f32 %v327, %v352
        %vm355 = vcmp.ge.s32.totalorder %v218, 4
        %vm356 = vcmp.ge.s32.totalorder %v219, 4
        %v357 = vsel %vm355, %v345, -inf
        %v358 = vsel %vm356, %v342, -inf
        %v361 = vcombine.low %v357, %v358
        %v363 = vmax.f32 %v354, %v361
        %364 = vrot.lane.b32.xlu0 %v187, 123
        %v365 = vpop.permute.xlu0 %364
        %366 = vrot.lane.b32.xlu0 %v189, 123
        %v367 = vpop.permute.xlu0 %366
        %vm368 = vcmask 1006592
        %v369 = vsel %vm368, %v365, %v367
        %v372 = vsel %vm368, %v367, -inf
        %373 = vrot.lane.b32.xlu0 %v187, 5
        %v374 = vpop.permute.xlu0 %373
        %375 = vrot.lane.b32.xlu0 %v189, 5
        %v376 = vpop.permute.xlu0 %375
        %vm377 = vcmask 39936
        %v378 = vsel %vm377, %v374, %v376
        %v381 = vsel %vm377, -inf, %v374
        %vm382 = vcmp.lt.s32.totalorder %v218, 11
        %vm383 = vcmp.lt.s32.totalorder %v219, 11
        %v384 = vsel %vm382, %v369, -inf
        %v385 = vsel %vm383, %v372, -inf
        %v388 = vcombine.low %v384, %v385
        %v390 = vmax.f32 %v363, %v388
        %vm391 = vcmp.ge.s32.totalorder %v218, 5
        %vm392 = vcmp.ge.s32.totalorder %v219, 5
        %v393 = vsel %vm391, %v381, -inf
        %v394 = vsel %vm392, %v378, -inf
        %v397 = vcombine.low %v393, %v394
        %v399 = vmax.f32 %v390, %v397
        %400 = vrot.lane.b32.xlu0 %v187, 122
        %v401 = vpop.permute.xlu0 %400
        %402 = vrot.lane.b32.xlu0 %v189, 122
        %v403 = vpop.permute.xlu0 %402
        %vm404 = vcmask 998400
        %v405 = vsel %vm404, %v401, %v403
        %v408 = vsel %vm404, %v403, -inf
        %409 = vrot.lane.b32.xlu0 %v187, 6
        %v410 = vpop.permute.xlu0 %409
        %411 = vrot.lane.b32.xlu0 %v189, 6
        %v412 = vpop.permute.xlu0 %411
        %vm413 = vcmask 48128
        %v414 = vsel %vm413, %v410, %v412
        %v417 = vsel %vm413, -inf, %v410
        %vm418 = vcmp.lt.s32.totalorder %v218, 10
        %vm419 = vcmp.lt.s32.totalorder %v219, 10
        %v420 = vsel %vm418, %v405, -inf
        %v421 = vsel %vm419, %v408, -inf
        %v424 = vcombine.low %v420, %v421
        %v426 = vmax.f32 %v399, %v424
        %vm427 = vcmp.ge.s32.totalorder %v218, 6
        %vm428 = vcmp.ge.s32.totalorder %v219, 6
        %v429 = vsel %vm427, %v417, -inf
        %v430 = vsel %vm428, %v414, -inf
        %v433 = vcombine.low %v429, %v430
        %v435 = vmax.f32 %v426, %v433
        %v437 = vcombine.high %v291, %v291
        %438 = vrot.lane.b32.xlu0 %v291, 96
        %v439 = vpop.permute.xlu0 %438
        %440 = vrot.lane.b32.xlu0 %v437, 96
        %v441 = vpop.permute.xlu0 %440
        %vm442 = vcmask 785408
        %v443 = vsel %vm442, %v439, %v441
        %v447 = vsel %vm442, -inf, %v439
        %v448 = vsel %vm442, %v441, -inf
        %452 = vrot.lane.b32.xlu0 %v447, 96
        %v453 = vpop.permute.xlu0 %452
        %454 = vrot.lane.b32.xlu0 %v443, 96
        %v455 = vpop.permute.xlu0 %454
        %456 = vrot.lane.b32.xlu0 %v448, 96
        %v457 = vpop.permute.xlu0 %456
        %458 = vrot.lane.b32.xlu0 -inf, 96
        %v459 = vpop.permute.xlu0 %458
        %v460 = vsel %vm442, %v453, %v455
        %v461 = vsel %vm442, %v455, %v457
        %v462 = vsel %vm442, %v457, %v459
        %v467 = vmax.f32 %v447, %v460
        %v468 = vmax.f32 %v443, %v461
        %v469 = vmax.f32 %v448, %v462
        %470 = vrot.lane.b32.xlu0 %v447, 112
        %v471 = vpop.permute.xlu0 %470
        %472 = vrot.lane.b32.xlu0 %v443, 112
        %v473 = vpop.permute.xlu0 %472
        %474 = vrot.lane.b32.xlu0 %v448, 112
        %v475 = vpop.permute.xlu0 %474
        %476 = vrot.lane.b32.xlu0 -inf, 112
        %v477 = vpop.permute.xlu0 %476
        %vm478 = vcmask 916480
        %v479 = vsel %vm478, %v471, %v473
        %v480 = vsel %vm478, %v473, %v475
        %v481 = vsel %vm478, %v475, %v477
        %v486 = vmax.f32 %v467, %v479
        %v487 = vmax.f32 %v468, %v480
        %v488 = vmax.f32 %v469, %v481
        %v489 = vmax.f32 %v459, %v477
        %494 = vrot.lane.b32.xlu0 %v486, 96
        %v495 = vpop.permute.xlu0 %494
        %496 = vrot.lane.b32.xlu0 %v487, 96
        %v497 = vpop.permute.xlu0 %496
        %498 = vrot.lane.b32.xlu0 %v488, 96
        %v499 = vpop.permute.xlu0 %498
        %500 = vrot.lane.b32.xlu0 %v489, 96
        %v501 = vpop.permute.xlu0 %500
        %v502 = vsel %vm442, %v495, %v497
        %v503 = vsel %vm442, %v497, %v499
        %v504 = vsel %vm442, %v499, %v501
        %v508 = vmax.f32 %v486, %v502
        %v509 = vmax.f32 %v487, %v503
        %v510 = vmax.f32 %v488, %v504
        %v514 = vrot.slane %v508, 4
        %v515 = vrot.slane %v509, 4
        %v516 = vrot.slane %v510, 4
        %517 = vrot.lane.b32.xlu0 %v514, 64
        %v518 = vpop.permute.xlu0 %517
        %519 = vrot.lane.b32.xlu0 %v515, 64
        %v520 = vpop.permute.xlu0 %519
        %521 = vrot.lane.b32.xlu0 %v516, 64
        %v522 = vpop.permute.xlu0 %521
        %vm523 = vcmask 523264
        %v524 = vsel %vm523, %v518, %v520
        %v525 = vsel %vm523, %v520, %v522
        %528 = vst [vmem:[#allocation2] sm:$0xf0] %v524
        %529 = vst [vmem:[#allocation2 + $0x8] sm:$0xf0] %v525
        %v531 = vcombine.high %v363, %v363
        %532 = vrot.lane.b32.xlu0 %v363, 96
        %v533 = vpop.permute.xlu0 %532
        %534 = vrot.lane.b32.xlu0 %v531, 96
        %v535 = vpop.permute.xlu0 %534
        %v536 = vsel %vm442, %v533, %v535
        %v540 = vsel %vm442, -inf, %v533
        %v541 = vsel %vm442, %v535, -inf
        %544 = vrot.lane.b32.xlu0 %v540, 96
        %v545 = vpop.permute.xlu0 %544
        %546 = vrot.lane.b32.xlu0 %v536, 96
        %v547 = vpop.permute.xlu0 %546
        %548 = vrot.lane.b32.xlu0 %v541, 96
        %v549 = vpop.permute.xlu0 %548
        %v550 = vsel %vm442, %v545, %v547
        %v551 = vsel %vm442, %v547, %v549
        %v552 = vsel %vm442, %v549, %v459
        %v556 = vmax.f32 %v540, %v550
        %v557 = vmax.f32 %v536, %v551
        %v558 = vmax.f32 %v541, %v552
        %559 = vrot.lane.b32.xlu0 %v540, 112
        %v560 = vpop.permute.xlu0 %559
        %561 = vrot.lane.b32.xlu0 %v536, 112
        %v562 = vpop.permute.xlu0 %561
        %563 = vrot.lane.b32.xlu0 %v541, 112
        %v564 = vpop.permute.xlu0 %563
        %v565 = vsel %vm478, %v560, %v562
        %v566 = vsel %vm478, %v562, %v564
        %v567 = vsel %vm478, %v564, %v477
        %v571 = vmax.f32 %v556, %v565
        %v572 = vmax.f32 %v557, %v566
        %v573 = vmax.f32 %v558, %v567
        %577 = vrot.lane.b32.xlu0 %v571, 64
        %v578 = vpop.permute.xlu0 %577
        %579 = vrot.lane.b32.xlu0 %v572, 64
        %v580 = vpop.permute.xlu0 %579
        %581 = vrot.lane.b32.xlu0 %v573, 64
        %v582 = vpop.permute.xlu0 %581
        %583 = vrot.lane.b32.xlu0 %v489, 64
        %v584 = vpop.permute.xlu0 %583
        %v585 = vsel %vm523, %v578, %v580
        %v586 = vsel %vm523, %v580, %v582
        %v587 = vsel %vm523, %v582, %v584
        %v591 = vmax.f32 %v571, %v585
        %v592 = vmax.f32 %v572, %v586
        %v593 = vmax.f32 %v573, %v587
        %594 = vrot.lane.b32.xlu0 %v571, 96
        %v595 = vpop.permute.xlu0 %594
        %596 = vrot.lane.b32.xlu0 %v572, 96
        %v597 = vpop.permute.xlu0 %596
        %598 = vrot.lane.b32.xlu0 %v573, 96
        %v599 = vpop.permute.xlu0 %598
        %v600 = vsel %vm442, %v595, %v597
        %v601 = vsel %vm442, %v597, %v599
        %v605 = vmax.f32 %v591, %v600
        %v606 = vmax.f32 %v592, %v601
        %v607 = vmax.f32 %v593, %v599
        %611 = vrot.lane.b32.xlu0 %v605, 96
        %v612 = vpop.permute.xlu0 %611
        %613 = vrot.lane.b32.xlu0 %v606, 96
        %v614 = vpop.permute.xlu0 %613
        %615 = vrot.lane.b32.xlu0 %v607, 96
        %v616 = vpop.permute.xlu0 %615
        %v617 = vsel %vm442, %v612, %v614
        %v618 = vsel %vm442, %v614, %v616
        %v622 = vmax.f32 %v605, %v617
        %v623 = vmax.f32 %v606, %v618
        %v624 = vmax.f32 %v607, %v616
        %628 = vrot.lane.b32.xlu0 %v622, 96
        %v629 = vpop.permute.xlu0 %628
        %630 = vrot.lane.b32.xlu0 %v623, 96
        %v631 = vpop.permute.xlu0 %630
        %632 = vrot.lane.b32.xlu0 %v624, 96
        %v633 = vpop.permute.xlu0 %632
        %v634 = vsel %vm442, %v629, %v631
        %v635 = vsel %vm442, %v631, %v633
        %638 = vst [vmem:[#allocation2 + $0x10] sm:$0xf] %v634
        %639 = vst [vmem:[#allocation2 + $0x18] sm:$0xf] %v635
        %v641 = vcombine.high %v435, %v435
        %642 = vrot.lane.b32.xlu0 %v435, 96
        %v643 = vpop.permute.xlu0 %642
        %644 = vrot.lane.b32.xlu0 %v641, 96
        %v645 = vpop.permute.xlu0 %644
        %v646 = vsel %vm442, %v643, %v645
        %v650 = vsel %vm442, -inf, %v643
        %v651 = vsel %vm442, %v645, -inf
        %654 = vrot.lane.b32.xlu0 %v650, 96
        %v655 = vpop.permute.xlu0 %654
        %656 = vrot.lane.b32.xlu0 %v646, 96
        %v657 = vpop.permute.xlu0 %656
        %658 = vrot.lane.b32.xlu0 %v651, 96
        %v659 = vpop.permute.xlu0 %658
        %v660 = vsel %vm442, %v655, %v657
        %v661 = vsel %vm442, %v657, %v659
        %v662 = vsel %vm442, %v659, %v459
        %v666 = vmax.f32 %v650, %v660
        %v667 = vmax.f32 %v646, %v661
        %v668 = vmax.f32 %v651, %v662
        %669 = vrot.lane.b32.xlu0 %v650, 112
        %v670 = vpop.permute.xlu0 %669
        %671 = vrot.lane.b32.xlu0 %v646, 112
        %v672 = vpop.permute.xlu0 %671
        %673 = vrot.lane.b32.xlu0 %v651, 112
        %v674 = vpop.permute.xlu0 %673
        %v675 = vsel %vm478, %v670, %v672
        %v676 = vsel %vm478, %v672, %v674
        %v677 = vsel %vm478, %v674, %v477
        %v681 = vmax.f32 %v666, %v675
        %v682 = vmax.f32 %v667, %v676
        %v683 = vmax.f32 %v668, %v677
        %687 = vrot.lane.b32.xlu0 %v681, 64
        %v688 = vpop.permute.xlu0 %687
        %689 = vrot.lane.b32.xlu0 %v682, 64
        %v690 = vpop.permute.xlu0 %689
        %691 = vrot.lane.b32.xlu0 %v683, 64
        %v692 = vpop.permute.xlu0 %691
        %v693 = vsel %vm523, %v688, %v690
        %v694 = vsel %vm523, %v690, %v692
        %v695 = vsel %vm523, %v692, %v584
        %v699 = vmax.f32 %v681, %v693
        %v700 = vmax.f32 %v682, %v694
        %v701 = vmax.f32 %v683, %v695
        %702 = vrot.lane.b32.xlu0 %v681, 96
        %v703 = vpop.permute.xlu0 %702
        %704 = vrot.lane.b32.xlu0 %v682, 96
        %v705 = vpop.permute.xlu0 %704
        %706 = vrot.lane.b32.xlu0 %v683, 96
        %v707 = vpop.permute.xlu0 %706
        %v708 = vsel %vm442, %v703, %v705
        %v709 = vsel %vm442, %v705, %v707
        %v713 = vmax.f32 %v699, %v708
        %v714 = vmax.f32 %v700, %v709
        %v715 = vmax.f32 %v701, %v707
        %719 = vrot.lane.b32.xlu0 %v713, 32
        %v720 = vpop.permute.xlu0 %719
        %721 = vrot.lane.b32.xlu0 %v714, 32
        %v722 = vpop.permute.xlu0 %721
        %723 = vrot.lane.b32.xlu0 %v715, 32
        %v724 = vpop.permute.xlu0 %723
        %vm725 = vcmask 261120
        %v726 = vsel %vm725, %v720, %v722
        %v727 = vsel %vm725, %v722, %v724
        %v730 = vmax.f32 %v713, %v726
        %v731 = vmax.f32 %v714, %v727
        %v734 = vrot.slane %v730, 4
        %v735 = vrot.slane %v731, 4
        %738 = vst [vmem:[#allocation2 + $0x10] sm:$0xf0] %v734
        %739 = vst [vmem:[#allocation2 + $0x18] sm:$0xf0] %v735
        %v740 = vld [vmem:[%s1] sm:$0xff]
        %v741 = vld [vmem:[#allocation2] sm:$0xff]
        %v742 = vld [vmem:[#allocation2 + $0x8] sm:$0xff]
        %v743 = vld [vmem:[#allocation2 + $0x10] sm:$0xff]
        %v744 = vld [vmem:[#allocation2 + $0x18] sm:$0xff]
        %v745 = vld [vmem:[%s2] sm:$0xff]
        %747 = vset.pattern.permute.xlu0 0
        %748 = vperm.xlu0 %747, %v745
        %v749 = vpop.permute.xlu0 %748
        %vm751 = vcmask 130048
        %v753 = vsel %vm751, %v740, 0
        %755 = vmatprep.subr.mxu0 0.0
        %756 = vmatpush1.msra.mxu0 0.0
        %757 = vmatprep.subr.mxu0 0.0
        %758 = vmatpush1.msra.mxu0 0.0
        %759 = vmatprep.subr.mxu0 0.0
        %760 = vmatpush1.msra.mxu0 0.0
        %761 = vmatprep.subr.mxu0 0.0
        %762 = vmatpush1.msra.mxu0 0.0
        %763 = vmatprep.subr.mxu0 0.0
        %764 = vmatpush1.msra.mxu0 0.0
        %765 = vmatprep.subr.mxu0 0.0
        %766 = vmatpush1.msra.mxu0 0.0
        %767 = vmatprep.subr.mxu0 0.0
        %768 = vmatpush1.msra.mxu0 0.0
        %769 = vmatprep.subr.mxu0 0.0
        %770 = vmatpush1.msra.mxu0 0.0
        %771 = vmatprep.subr.mxu0 0.0
        %772 = vmatpush1.msra.mxu0 0.0
        %773 = vmatprep.subr.mxu0 0.0
        %774 = vmatpush1.msra.mxu0 0.0
        %775 = vmatprep.subr.mxu0 0.0
        %776 = vmatpush1.msra.mxu0 0.0
        %777 = vmatprep.subr.mxu0 0.0
        %778 = vmatpush1.msra.mxu0 0.0
        %779 = vmatprep.subr.mxu0 0.0
        %780 = vmatpush1.msra.mxu0 0.0
        %781 = vmatprep.subr.mxu0 0.0
        %782 = vmatpush1.msra.mxu0 0.0
        %783 = vmatprep.subr.mxu0 %v744
        %784 = vmatpush1.msra.mxu0 %v743
        %785 = vmatprep.subr.mxu0 %v742
        %786 = vmatpush1.msra.mxu0 %v741
        %787 = vmatprep.subr.mxu0 0.0
        %788 = vmatpush2.msra.mxu0 0.0
        %789 = vmatprep.subr.mxu0 0.0
        %790 = vmatpush2.msra.mxu0 0.0
        %791 = vmatprep.subr.mxu0 0.0
        %792 = vmatpush2.msra.mxu0 0.0
        %793 = vmatprep.subr.mxu0 0.0
        %794 = vmatpush2.msra.mxu0 0.0
        %795 = vmatprep.subr.mxu0 0.0
        %796 = vmatpush2.msra.mxu0 0.0
        %797 = vmatprep.subr.mxu0 0.0
        %798 = vmatpush2.msra.mxu0 0.0
        %799 = vmatprep.subr.mxu0 0.0
        %800 = vmatpush2.msra.mxu0 0.0
        %801 = vmatprep.subr.mxu0 0.0
        %802 = vmatpush2.msra.mxu0 0.0
        %803 = vmatprep.subr.mxu0 0.0
        %804 = vmatpush2.msra.mxu0 0.0
        %805 = vmatprep.subr.mxu0 0.0
        %806 = vmatpush2.msra.mxu0 0.0
        %807 = vmatprep.subr.mxu0 0.0
        %808 = vmatpush2.msra.mxu0 0.0
        %809 = vmatprep.subr.mxu0 0.0
        %810 = vmatpush2.msra.mxu0 0.0
        %811 = vmatprep.subr.mxu0 0.0
        %812 = vmatpush2.msra.mxu0 0.0
        %813 = vmatprep.subr.mxu0 0.0
        %814 = vmatpush2.msra.mxu0 0.0
        %815 = vmatprep.subr.mxu0 0.0
        %816 = vmatpush2.msra.mxu0 0.0
        %817 = vmatprep.subr.mxu0 0.0
        %818 = vmatpush2.msra.mxu0 0.0
        %819 = vmatprep.mubr.f32.mxu0 0.0
        %820 = vmatmul.mubr.f32.gmra.mxu0 %v753
        %v821 = vpop.f32.mrf.mxu0
        %v822 = vadd.f32 %v749, %v821
        %v823 = vpop.f32.mrf.mxu0
        %v824 = vadd.f32 %v749, %v823
        %825 = vdwg.mxu0
        %v826 = vxor.u32 %v822, 2147483648
        %v827 = vxor.u32 %v824, 2147483648
        %v828 = vmul.f32 %v826, 1.442695
        %v829 = vpow.pop %v828
        %v830 = vmul.f32 %v827, 1.442695
        %v831 = vpow.pop %v830
        %v832 = vadd.f32 %v829, 1.0
        %v833 = vadd.f32 %v831, 1.0
        %v834 = vrcp.pop %v832
        %v835 = vmul.f32 1.0, %v834
        %v836 = vrcp.pop %v833
        %v837 = vmul.f32 1.0, %v836
        %v838 = vmul.f32 %v822, %v835
        %v839 = vmul.f32 %v824, %v837
        %840 = vst [vmem:[%s186] sm:$0xff] %v838
        %841 = vst [vmem:[%s186 + $0x8] sm:$0xff] %v839
        %s842 = sand.u32 %s96, 1
        %s843 = scalar_lea.sflag [#allocation5], %s842
        %s844 = sand.u32 %s96, 1
        %s845 = smul.addr %s844, 16
        %s846 = scalar_lea.vmem [#allocation6], %s845
        // Predicated region
        $region37: #{tpu_custom_call.1} parent=31 // pred_check
          %p847 = pneg %p106
        $region38: #{tpu_custom_call.1} parent=31 // pred_check_branch
          %849 = sbr.rel (%p847) target = $region40
        $region39: #{tpu_custom_call.1} parent=31 // pred_region
          %s851 = ssub.s32 256, 256
          %852 = vsyncadd %s843, %s851
          %s853 = smul.addr %s20, 2
          %s854 = smul.addr %s853, 128
          %s855 = scalar_lea.hbm %s3, %s854
          %s857 = sshll.u32 %s846, 4
          %s858 = int_to_ptr.vmem [resolvable:$true] %s857
          %860 = dma.vmem_to_hbm [thread:$0]  %s858, 256, %s855, %s843
        $region40: #{tpu_custom_call.1} parent=31 // pred_fallthru
          _
      $region32: #{tpu_custom_call.1} parent=5 // pred_fallthru
        _
      %p861 = scmp.le.s32.totalorder 2, %s15
      // Predicated region
      $region41: #{tpu_custom_call.1} parent=5 // pred_check
        %p862 = pneg %p861
      $region42: #{tpu_custom_call.1} parent=5 // pred_check_branch
        %864 = sbr.rel (%p862) target = $region44
      $region43: #{tpu_custom_call.1} parent=5 // pred_region
        %s865 = ssub.s32 %s15, 2
        // Predicated region
        $region45: #{tpu_custom_call.1} parent=43 // pred_check
          %p866 = pneg %p112
        $region46: #{tpu_custom_call.1} parent=43 // pred_check_branch
          %868 = sbr.rel (%p866) target = $region48
        $region47: #{tpu_custom_call.1} parent=43 // pred_region
          %s869 = sand.u32 %s97, 1
          %s870 = scalar_lea.sflag [#allocation5], %s869
          %s871 = sand.u32 %s97, 1
          %s872 = smul.addr %s871, 16
          %s873 = scalar_lea.vmem [#allocation6], %s872
          %874 = dma.done %s870, 256
        $region48: #{tpu_custom_call.1} parent=43 // pred_fallthru
          _
      $region44: #{tpu_custom_call.1} parent=5 // pred_fallthru
        _
    $region6: #{tpu_custom_call.1} parent=1 // loop_footer
      %s19 = sadd.s32 1, %s15
    $region7: #{tpu_custom_call.1} parent=1 // loop_footer_branch
      %14 = sbr.rel target = $region3
    $region8: #{tpu_custom_call.1} parent=1 // loop_exit
      _
    %875 = vsyncpa [#allocation4], 1
    %s876 = scalar_lea.sflag [#allocation4], 1
    %877 = vsyncpa %s876, 1
    %878 = vsyncpa [#allocation5], 1
    %s879 = scalar_lea.sflag [#allocation5], 1
    %880 = vsyncpa %s879, 1

</llo_original>
